<compile_context>
chip_gen: v6e
topology: v6e:2x2x1
jax: 0.10.0
libtpu: 0.0.40
codegen_flags: <defaults>
</compile_context>

<pallas_src>
import jax
import jax.numpy as jnp
from jax.experimental import pallas as pl
from jax.experimental.pallas import tpu as pltpu


_HIDDEN = 256
_MAX_SPATIAL_TILE = 2048            # lanes per spatial tile (multiple of 128)
_MAX_TILE_BYTES = 4 * 1024 * 1024   # per input buffer (Pallas double-buffers it)


def _choose_tiles(rows, spatial):
    """Pick (row_tile, spatial_tile) obeying TPU (8,128) block rules and the VMEM budget."""
    tile_s = spatial if spatial <= _MAX_SPATIAL_TILE else _MAX_SPATIAL_TILE
    row_cap = max(8, min(512, _MAX_TILE_BYTES // (tile_s * 4)))
    if rows <= row_cap:
        return rows, tile_s          # full row axis -> always a legal block dim
    tile_r = rows                    # fallback: single (full) row block
    t = (row_cap // 8) * 8
    while t >= 8:                    # largest multiple of 8 that evenly divides rows
        if rows % t == 0:
            tile_r = t
            break
        t -= 8
    return tile_r, tile_s


def _global_avg_pool(x2d):
    """x2d: (rows, S) -> (rows, 1) f32 mean over the last axis, gridded + pipelined."""
    rows, s = x2d.shape
    tile_r, tile_s = _choose_tiles(rows, s)
    n_row = rows // tile_r
    n_spa = pl.cdiv(s, tile_s)
    ragged = (s % tile_s) != 0
    inv_s = 1.0 / float(s)

    def kernel(x_ref, sum_ref):
        s_idx = pl.program_id(1)

        @pl.when(s_idx == 0)
        def _():
            sum_ref[...] = jnp.zeros_like(sum_ref)

        tile = x_ref[...].astype(jnp.float32)
        if ragged:
            # Mask lanes past the true spatial extent in the last (partial) tile.
            lane = jax.lax.broadcasted_iota(jnp.int32, tile.shape, 1)
            tile = jnp.where(lane + s_idx * tile_s < s, tile, 0.0)
        sum_ref[...] += jnp.sum(tile, axis=-1, keepdims=True)

        @pl.when(s_idx == n_spa - 1)
        def _():
            sum_ref[...] *= inv_s    # single multiply in the epilogue (true H*W)

    return pl.pallas_call(
        kernel,
        out_shape=jax.ShapeDtypeStruct((rows, 1), jnp.float32),
        grid=(n_row, n_spa),
        in_specs=[pl.BlockSpec((tile_r, tile_s), lambda r, t: (r, t))],
        out_specs=pl.BlockSpec((tile_r, 1), lambda r, t: (r, 0)),
        compiler_params=pltpu.CompilerParams(
            dimension_semantics=("parallel", "arbitrary"),
            vmem_limit_bytes=32 * 1024 * 1024,
        ),
    )(x2d)


def _mlp_kernel(p_ref, w1_ref, b1_ref, w2_ref, b2_ref, o_ref):
    # p_ref : (N, C) f32 pooled features
    # w1_ref: (C, 256), b1_ref: (1, 256), w2_ref: (256, 1), b2_ref: (1, 1)
    pooled = p_ref[...]
    h = jnp.dot(pooled, w1_ref[...], preferred_element_type=jnp.float32)
    h = jnp.maximum(h + b1_ref[...], 0.0)                                  # (N, 256)
    logit = jnp.dot(h, w2_ref[...], preferred_element_type=jnp.float32) + b2_ref[...]
    o_ref[...] = jax.nn.sigmoid(logit).astype(o_ref.dtype)                 # (N, 1)


def _mlp(pooled, w1, b1, w2, b2):
    n = pooled.shape[0]
    return pl.pallas_call(
        _mlp_kernel,
        out_shape=jax.ShapeDtypeStruct((n, 1), jnp.float32),
        # Everything is tiny (N<=16, C<=a few hundred, hidden=256): keep whole operands in VMEM.
        in_specs=[pl.BlockSpec(memory_space=pltpu.VMEM)] * 5,
        out_specs=pl.BlockSpec(memory_space=pltpu.VMEM),
    )(pooled, w1, b1.reshape(1, -1), w2, b2.reshape(1, 1))


def adaptive_alpha_layer(x_nchw, w1, b1, w2, b2):
    """x_nchw: (N, C, H, W) float; returns alpha of shape (N, 1) float32."""
    n, c, h, w = x_nchw.shape
    # Free row-major reshape to a lane-dense 2D view; no wrapper-side dtype cast.
    x2d = x_nchw.reshape(n * c, h * w)
    pooled = _global_avg_pool(x2d).reshape(n, c)      # (N, C) f32
    return _mlp(pooled, w1, b1, w2, b2)


def make_params(in_channels, key):
    """Deterministic synthetic params matching nn.Linear(in_channels,256), nn.Linear(256,1)."""
    k1, k2, k3, k4 = jax.random.split(key, 4)
    # Stored already transposed relative to PyTorch's (out, in) convention:
    w1 = jax.random.normal(k1, (in_channels, _HIDDEN), jnp.float32) * 0.05  # fc1.weight.T
    b1 = jax.random.normal(k2, (_HIDDEN,), jnp.float32) * 0.05              # fc1.bias
    w2 = jax.random.normal(k3, (_HIDDEN, 1), jnp.float32) * 0.05            # fc2.weight.T
    b2 = jax.random.normal(k4, (1,), jnp.float32) * 0.05                    # fc2.bias
    return w1, b1, w2, b2


def _reference(x_nchw, w1, b1, w2, b2):
    pooled = jnp.mean(x_nchw.astype(jnp.float32), axis=(2, 3))
    h = jax.nn.relu(pooled @ w1 + b1)
    return jax.nn.sigmoid(h @ w2 + b2)


if __name__ == "__main__":
    key = jax.random.PRNGKey(0)
    kx, kp, kx2, kp2 = jax.random.split(key, 4)

    # Small primary check (matches the module's toy config).
    N, C, H, W = 2, 4, 16, 16
    x = jax.random.normal(kx, (N, C, H, W), jnp.float32)
    w1, b1, w2, b2 = make_params(C, kp)

    alpha = adaptive_alpha_layer(x, w1, b1, w2, b2)
    alpha = jax.block_until_ready(alpha)
    ref = _reference(x, w1, b1, w2, b2)
    assert alpha.shape == (N, 1), alpha.shape
    assert jnp.allclose(alpha, ref, atol=1e-5, rtol=1e-5), (alpha, ref)

    # Second check: exercises the multi-tile spatial grid + ragged-last-tile mask path
    # (H*W = 2304 > 2048-lane tile cap, not a multiple of the tile).
    N2, C2, H2, W2 = 2, 8, 48, 48
    x2 = jax.random.normal(kx2, (N2, C2, H2, W2), jnp.float32)
    w1b, b1b, w2b, b2b = make_params(C2, kp2)

    alpha2 = adaptive_alpha_layer(x2, w1b, b1b, w2b, b2b)
    alpha2 = jax.block_until_ready(alpha2)
    ref2 = _reference(x2, w1b, b1b, w2b, b2b)
    assert alpha2.shape == (N2, 1), alpha2.shape
    assert jnp.allclose(alpha2, ref2, atol=1e-5, rtol=1e-5), (alpha2, ref2)

    print("KERNEL_OK")
</pallas_src>

<mosaic_0001>
module attributes {stable_mosaic.version = 11 : i64} {
  func.func @kernel(%arg0: i32, %arg1: i32, %arg2: memref<8x256xf32, #tpu.memory_space<vmem>>, %arg3: memref<8x1xf32, #tpu.memory_space<vmem>>) attributes {dimension_semantics = [#tpu.dimension_semantics<parallel>, #tpu.dimension_semantics<arbitrary>], iteration_bounds = array<i64: 1, 1>, scalar_prefetch = 0 : i64, scratch_operands = 0 : i64, tpu.core_type = #tpu.core_type<tc>, window_params = [{transform_indices = @transform_0, window_bounds = array<i64: 8, 256>}, {transform_indices = @transform_1, window_bounds = array<i64: 8, 1>}]} {
    %c0_i32 = arith.constant 0 : i32
    %0 = arith.cmpi eq, %arg1, %c0_i32 : i32
    %1 = arith.extui %0 : i1 to i32
    %c0_i32_0 = arith.constant 0 : i32
    %2 = arith.cmpi ne, %1, %c0_i32_0 : i32
    scf.if %2 {
      %cst_8 = arith.constant 0.000000e+00 : f32
      %12 = vector.broadcast %cst_8 : f32 to vector<8x1xf32>
      %c0_9 = arith.constant 0 : index
      %c0_10 = arith.constant 0 : index
      %13 = vector.load %arg3[%c0_9, %c0_10] : memref<8x1xf32, #tpu.memory_space<vmem>>, vector<8x1xf32>
      tpu.vector_store %arg3[%c0_9, %c0_10], %12 {strides = array<i32>} : memref<8x1xf32, #tpu.memory_space<vmem>>, vector<8x1xf32>,
    } else {
    }
    %c0 = arith.constant 0 : index
    %c0_1 = arith.constant 0 : index
    %3 = vector.load %arg2[%c0, %c0_1] : memref<8x256xf32, #tpu.memory_space<vmem>>, vector<8x256xf32>
    %c0_2 = arith.constant 0 : index
    %c0_3 = arith.constant 0 : index
    %4 = vector.load %arg3[%c0_2, %c0_3] : memref<8x1xf32, #tpu.memory_space<vmem>>, vector<8x1xf32>
    %cst = arith.constant dense<0.000000e+00> : vector<8xf32>
    %5 = vector.multi_reduction <add>, %3, %cst [1] : vector<8x256xf32> to vector<8xf32>
    %6 = vector.shape_cast %5 : vector<8xf32> to vector<8x1xf32>
    %7 = arith.addf %4, %6 : vector<8x1xf32>
    %c0_4 = arith.constant 0 : index
    %c0_5 = arith.constant 0 : index
    %8 = vector.load %arg3[%c0_4, %c0_5] : memref<8x1xf32, #tpu.memory_space<vmem>>, vector<8x1xf32>
    tpu.vector_store %arg3[%c0_4, %c0_5], %7 {strides = array<i32>} : memref<8x1xf32, #tpu.memory_space<vmem>>, vector<8x1xf32>,
    %c0_i32_6 = arith.constant 0 : i32
    %9 = arith.cmpi eq, %arg1, %c0_i32_6 : i32
    %10 = arith.extui %9 : i1 to i32
    %c0_i32_7 = arith.constant 0 : i32
    %11 = arith.cmpi ne, %10, %c0_i32_7 : i32
    scf.if %11 {
      %c0_8 = arith.constant 0 : index
      %c0_9 = arith.constant 0 : index
      %12 = vector.load %arg3[%c0_8, %c0_9] : memref<8x1xf32, #tpu.memory_space<vmem>>, vector<8x1xf32>
      %cst_10 = arith.constant 3.906250e-03 : f32
      %13 = vector.broadcast %cst_10 : f32 to vector<8x1xf32>
      %14 = arith.mulf %12, %13 : vector<8x1xf32>
      %c0_11 = arith.constant 0 : index
      %c0_12 = arith.constant 0 : index
      %15 = vector.load %arg3[%c0_11, %c0_12] : memref<8x1xf32, #tpu.memory_space<vmem>>, vector<8x1xf32>
      tpu.vector_store %arg3[%c0_11, %c0_12], %14 {strides = array<i32>} : memref<8x1xf32, #tpu.memory_space<vmem>>, vector<8x1xf32>,
    } else {
    }
    return
  }
  func.func @transform_0(%arg0: i32, %arg1: i32) -> (i32, i32) {
    %c0_i32 = arith.constant 0 : i32
    return %arg0, %arg1 : i32, i32
  }
  func.func @transform_1(%arg0: i32, %arg1: i32) -> (i32, i32) {
    %c0_i32 = arith.constant 0 : i32
    %c0_i32_0 = arith.constant 0 : i32
    return %arg0, %c0_i32 : i32, i32
  }
}

</mosaic_0001>

<llo_original>
// kernel: tpu_custom_call.1
$region0: #{tpu_custom_call.1}
  #allocation0 [shape = 'u32[]', space=smem, size = 0x4, offset = 0x4, fixed_abs, tag = 'smem constant byte address 0x4 - core index']
  #allocation1 [shape = 'u32[144,128]{1,0:T(1,128)}', space=vmem, size = 0x12000, scoped, tag = 'internal scratch']
  %s0 = inlined_call_operand.hbm [shape: f32[8,256], index: 0, kind: input, shape index: {}]
  %s1 = inlined_call_operand.vmem [shape: f32[8,1], index: 1, kind: output, shape index: {}]
  %s2 = sld [smem:[#allocation0]]
  $region26: #{tpu_custom_call.1} parent=0
    _
  %s4 = ssub.s32 1, %s2
  %s5 = scalar_select 0, %s4, %s2
  $region1: #{tpu_custom_call.1} parent=0
    #allocation2 [shape = 'u8[8192]{0}', space=vmem, size = 0x2000, scoped, tag = 'input window, operand 0, single buffered']
    #allocation3 [shape = 's32[1]{0}', space=sflag, size = 0x4, scoped, tag = 'scoped memory for tpu_custom_call.1']
    %6 = vsyncpa [#allocation3], 0
    // Predicated region
    $region2: #{tpu_custom_call.1} parent=1 // pred_check
      _
    $region3: #{tpu_custom_call.1} parent=1 // pred_check_branch
      %8 = sbr.rel (0) target = $region5
    $region4: #{tpu_custom_call.1} parent=1 // pred_region
      %s10 = ssub.s32 256, 256
      %11 = vsyncadd [#allocation3], %s10
      %s13 = sshll.u32 [#allocation2], 4
      %s14 = int_to_ptr.vmem [resolvable:$true] %s13
      %16 = dma.hbm_to_vmem [thread:$0]  %s0, 256, %s14, [#allocation3]
    $region5: #{tpu_custom_call.1} parent=1 // pred_fallthru
      _
    // Predicated region
    $region6: #{tpu_custom_call.1} parent=1 // pred_check
      _
    $region7: #{tpu_custom_call.1} parent=1 // pred_check_branch
      %18 = sbr.rel (0) target = $region9
    $region8: #{tpu_custom_call.1} parent=1 // pred_region
      %19 = dma.done [#allocation3], 256
    $region9: #{tpu_custom_call.1} parent=1 // pred_fallthru
      _
    %p20 = scmp.eq.s32.totalorder 0, 0
    // Predicated region
    $region10: #{tpu_custom_call.1} parent=1 // pred_check
      %p21 = pneg %p20
    $region11: #{tpu_custom_call.1} parent=1 // pred_check_branch
      %23 = sbr.rel (%p21) target = $region13
    $region12: #{tpu_custom_call.1} parent=1 // pred_region
      %vm24 = vcmask 7168
      %25 = vst.msk [vmem:[%s1] sm:$0xff] %vm24, 0.0
    $region13: #{tpu_custom_call.1} parent=1 // pred_fallthru
      _
    %v26 = vld [vmem:[#allocation2] sm:$0xff]
    %v27 = vld [vmem:[#allocation2 + $0x8] sm:$0xff]
    %v28 = vld [vmem:[%s1] sm:$0xff]
    %v29 = vadd.f32 %v26, %v27
    %30 = vadd.xlane.f32.xlu0 %v29
    %v31 = vpop.xlane.xlu0 %30
    %v32 = vadd.f32 %v28, %v31
    %vm33 = vcmask 7168
    %34 = vst.msk [vmem:[%s1] sm:$0xff] %vm33, %v32
    // Predicated region
    $region14: #{tpu_custom_call.1} parent=1 // pred_check
      %p35 = pneg %p20
    $region15: #{tpu_custom_call.1} parent=1 // pred_check_branch
      %37 = sbr.rel (%p35) target = $region17
    $region16: #{tpu_custom_call.1} parent=1 // pred_region
      %v38 = vld [vmem:[%s1] sm:$0xff]
      %v39 = vmul.f32 %v38, 0.00390625
      %40 = vst.msk [vmem:[%s1] sm:$0xff] %vm33, %v39
    $region17: #{tpu_custom_call.1} parent=1 // pred_fallthru
      _
    // Predicated region
    $region18: #{tpu_custom_call.1} parent=1 // pred_check
      _
    $region19: #{tpu_custom_call.1} parent=1 // pred_check_branch
      %42 = sbr.rel (0) target = $region21
    $region20: #{tpu_custom_call.1} parent=1 // pred_region
      _
    $region21: #{tpu_custom_call.1} parent=1 // pred_fallthru
      _
    // Predicated region
    $region22: #{tpu_custom_call.1} parent=1 // pred_check
      _
    $region23: #{tpu_custom_call.1} parent=1 // pred_check_branch
      %44 = sbr.rel (0) target = $region25
    $region24: #{tpu_custom_call.1} parent=1 // pred_region
      _
    $region25: #{tpu_custom_call.1} parent=1 // pred_fallthru
      _
    %45 = vsyncpa [#allocation3], 1

</llo_original>
